<compile_context>
chip_gen: v5e
topology: v5e:2x2
jax: 0.10.0
libtpu: 0.0.40
codegen_flags: <defaults>
</compile_context>

<pallas_src>
import jax
import jax.numpy as jnp
from jax.experimental import pallas as pl
from jax.experimental.pallas import tpu as pltpu


HID = 64            # per-trunk hidden width (matches torch module)
H2 = 2 * HID        # packed hidden width = 128 -> one full vreg lane set
TB_MAX = 2048       # batch-tile cap (VMEM footprint stays << limits)


# ---------------------------------------------------------------------------
# Pallas kernel: fused packed MLP (3 bf16 matmuls w/ f32 acc + 2 f32 tanh)
# ---------------------------------------------------------------------------
def mlp_agent_kernel(obs_ref, w1_ref, w2_ref, wh_ref, b_ref, out_ref):
    bf16 = jnp.bfloat16
    f32 = jnp.float32
    ac_p1 = wh_ref.shape[1]

    b = b_ref[...]                                  # [3, 128] f32 (all biases)
    x = obs_ref[...]                                # [TB, ob] f32

    h = jnp.tanh(                                   # [TB, 128] f32
        jnp.dot(x.astype(bf16), w1_ref[...], preferred_element_type=f32)
        + b[0:1, :])
    h = jnp.tanh(                                   # [TB, 128] f32
        jnp.dot(h.astype(bf16), w2_ref[...], preferred_element_type=f32)
        + b[1:2, :])
    # Packed head: columns [0:ac] = policy mean, column [ac] = value.
    out_ref[...] = (
        jnp.dot(h.astype(bf16), wh_ref[...], preferred_element_type=f32)
        + b[2:3, :ac_p1])                           # [TB, ac+1] f32


# ---------------------------------------------------------------------------
# Wrapper
# ---------------------------------------------------------------------------
def _round_up(x, m):
    return ((x + m - 1) // m) * m


@jax.jit
def mlp_agent_forward(obs, kp):
    B, ob = obs.shape
    ac_p1 = kp["wh"].shape[1]
    ac = ac_p1 - 1

    if B <= 8:
        TB = B                      # single (possibly sub-8) tile, full-dim block
    else:
        # >= 2 grid steps so "parallel" can shard across v7x's two TCs;
        # cap at 2048 rows/tile to amortize per-step overhead.
        TB = min(TB_MAX, _round_up(pl.cdiv(B, 2), 8))
    grid = (pl.cdiv(B, TB),)

    flops = 2 * B * (ob * H2 + H2 * H2 + H2 * ac_p1)
    transcendentals = 2 * B * H2                     # two tanh layers, 128 wide
    bytes_accessed = (
        4 * B * ob                                   # obs in (f32)
        + 2 * (ob * H2 + H2 * H2 + H2 * ac_p1)       # bf16 weights
        + 4 * 3 * H2                                 # packed biases (f32)
        + 4 * B * ac_p1)                             # packed output (f32)

    out = pl.pallas_call(
        mlp_agent_kernel,
        out_shape=jax.ShapeDtypeStruct((B, ac_p1), jnp.float32),
        grid=grid,
        in_specs=[
            pl.BlockSpec((TB, ob), lambda i: (i, 0)),      # obs streams
            pl.BlockSpec((ob, H2), lambda i: (0, 0)),      # W1 (bf16) resident
            pl.BlockSpec((H2, H2), lambda i: (0, 0)),      # W2 (bf16) block-diag
            pl.BlockSpec((H2, ac_p1), lambda i: (0, 0)),   # packed head W (bf16)
            pl.BlockSpec((3, H2), lambda i: (0, 0)),       # all biases, one tile
        ],
        out_specs=pl.BlockSpec((TB, ac_p1), lambda i: (i, 0)),
        compiler_params=pltpu.CompilerParams(
            dimension_semantics=("parallel",)),            # megacore on v7x
        cost_estimate=pl.CostEstimate(
            flops=flops,
            transcendentals=transcendentals,
            bytes_accessed=bytes_accessed),
    )(obs, kp["w1"], kp["w2"], kp["wh"], kp["bias"])

    mean = out[:, :ac]                    # [B, ac]
    v = out[:, ac]                        # [B]
    std = jnp.exp(kp["logstd"])           # [ac]
    return mean, std, v


# ---------------------------------------------------------------------------
# Parameter init (mirrors torch orthogonal_/constant_) + one-time packing
# ---------------------------------------------------------------------------
def orthogonal_(key, out_features, in_features, gain):
    """Torch-style orthogonal init for a weight of shape [out, in]."""
    rows, cols = out_features, in_features
    big, small = max(rows, cols), min(rows, cols)
    a = jax.random.normal(key, (big, small), dtype=jnp.float32)
    q, r = jnp.linalg.qr(a)
    d = jnp.diagonal(r)
    q = q * jnp.where(d == 0, 1.0, jnp.sign(d))   # guard zero diagonal
    if rows < cols:
        q = q.T
    return gain * q[:rows, :cols]


def init_params(key, ob_space, ac_space):
    keys = jax.random.split(key, 6)
    relu_gain = jnp.sqrt(2.0)             # nn.init.calculate_gain('relu')

    # Weights stored transposed ([in, out]) for x @ W in the kernel.
    return {
        "pi_w1": orthogonal_(keys[0], 64, ob_space, relu_gain).T,
        "pi_b1": jnp.zeros((1, 64), jnp.float32),
        "pi_w2": orthogonal_(keys[1], 64, 64, relu_gain).T,
        "pi_b2": jnp.zeros((1, 64), jnp.float32),
        "mean_w": orthogonal_(keys[2], ac_space, 64, 0.01).T,
        "mean_b": jnp.zeros((1, ac_space), jnp.float32),
        "logstd": jnp.zeros((ac_space,), jnp.float32),
        "vf_w1": orthogonal_(keys[3], 64, ob_space, relu_gain).T,
        "vf_b1": jnp.zeros((1, 64), jnp.float32),
        "vf_w2": orthogonal_(keys[4], 64, 64, relu_gain).T,
        "vf_b2": jnp.zeros((1, 64), jnp.float32),
        "vf_out_w": orthogonal_(keys[5], 1, 64, 1.0).T,
        "vf_out_b": jnp.zeros((1, 1), jnp.float32),
    }


def pack_params(p):
    """Pack the two 64-wide trunks into one 128-wide network (f32, done once)."""
    ac = p["mean_w"].shape[1]
    z = jnp.zeros((HID, HID), jnp.float32)

    w1 = jnp.concatenate([p["pi_w1"], p["vf_w1"]], axis=1)             # [ob, 128]
    w2 = jnp.block([[p["pi_w2"], z], [z, p["vf_w2"]]])                 # [128, 128]
    wh = jnp.block([
        [p["mean_w"], jnp.zeros((HID, 1), jnp.float32)],
        [jnp.zeros((HID, ac), jnp.float32), p["vf_out_w"]],
    ])                                                                 # [128, ac+1]

    b1 = jnp.concatenate([p["pi_b1"], p["vf_b1"]], axis=1)             # [1, 128]
    b2 = jnp.concatenate([p["pi_b2"], p["vf_b2"]], axis=1)             # [1, 128]
    bh = jnp.concatenate(
        [p["mean_b"], p["vf_out_b"],
         jnp.zeros((1, H2 - (ac + 1)), jnp.float32)], axis=1)          # [1, 128]
    bias = jnp.concatenate([b1, b2, bh], axis=0)                       # [3, 128]

    return {"w1": w1, "w2": w2, "wh": wh, "bias": bias, "logstd": p["logstd"]}


def bf16_weights(packed):
    """One-time bf16 cast of the MXU operands (biases/logstd stay f32)."""
    kp = dict(packed)
    for k in ("w1", "w2", "wh"):
        kp[k] = packed[k].astype(jnp.bfloat16)
    return kp


# ---------------------------------------------------------------------------
# Pure-JAX references for correctness
# ---------------------------------------------------------------------------
def reference_forward(obs, p):
    """Unpacked f32 reference, mirrors the torch module exactly."""
    h = jnp.tanh(obs @ p["pi_w1"] + p["pi_b1"])
    h = jnp.tanh(h @ p["pi_w2"] + p["pi_b2"])
    mean = h @ p["mean_w"] + p["mean_b"]
    g = jnp.tanh(obs @ p["vf_w1"] + p["vf_b1"])
    g = jnp.tanh(g @ p["vf_w2"] + p["vf_b2"])
    vf = g @ p["vf_out_w"] + p["vf_out_b"]
    v = jnp.sum(vf, axis=1)
    std = jnp.exp(p["logstd"])
    return mean, std, v


def packed_reference(obs, kp, bf16_dots):
    """Packed-layout reference; bf16_dots=True mimics the kernel numerics."""
    f32 = jnp.float32
    prep = (lambda x: x.astype(jnp.bfloat16)) if bf16_dots else (lambda x: x)
    b = kp["bias"].astype(f32)
    ac_p1 = kp["wh"].shape[1]
    h = jnp.tanh(jnp.dot(prep(obs), prep(kp["w1"]),
                         preferred_element_type=f32) + b[0:1, :])
    h = jnp.tanh(jnp.dot(prep(h), prep(kp["w2"]),
                         preferred_element_type=f32) + b[1:2, :])
    out = jnp.dot(prep(h), prep(kp["wh"]),
                  preferred_element_type=f32) + b[2:3, :ac_p1]
    return out[:, :ac_p1 - 1], jnp.exp(kp["logstd"]), out[:, ac_p1 - 1]


if __name__ == "__main__":
    key = jax.random.PRNGKey(0)
    k_param, k_obs = jax.random.split(key)

    B, OB_SPACE, AC_SPACE = 8, 16, 4
    params = init_params(k_param, OB_SPACE, AC_SPACE)
    packed_f32 = pack_params(params)
    kp = bf16_weights(packed_f32)
    obs = jax.random.normal(k_obs, (B, OB_SPACE), dtype=jnp.float32)

    mean, std, v = mlp_agent_forward(obs, kp)
    jax.block_until_ready((mean, std, v))
    assert mean.shape == (B, AC_SPACE) and v.shape == (B,) and std.shape == (AC_SPACE,)

    # 1) The 128-wide packing is exact (f32 packed path == f32 unpacked torch-equiv).
    pm, ps, pv = packed_reference(obs, packed_f32, bf16_dots=False)
    rm, rs, rv = reference_forward(obs, params)
    assert jnp.allclose(pm, rm, atol=1e-5, rtol=1e-5)
    assert jnp.allclose(pv, rv, atol=1e-5, rtol=1e-5)

    # 2) Kernel matches a numerically-identical jnp path (bf16 operands, f32 acc).
    mm, ms, mv = packed_reference(obs, kp, bf16_dots=True)
    assert jnp.allclose(mean, mm, atol=1e-4, rtol=1e-4)
    assert jnp.allclose(v, mv, atol=1e-4, rtol=1e-4)
    assert jnp.allclose(std, ms, atol=1e-6)

    # 3) Loose end-to-end check vs the full-f32 reference (bf16-operand error budget).
    assert jnp.allclose(mean, rm, atol=5e-2, rtol=5e-2)
    assert jnp.allclose(v, rv, atol=5e-2, rtol=5e-2)
    assert jnp.allclose(std, rs, atol=1e-6)

    # TODO(synk): pd.sample()/log_prob/entropy (Normal distribution methods in
    # statistics()/step()) are stochastic/host-side glue and stay outside the
    # kernel; the forward() hot path is fully fused in Pallas.
    print("KERNEL_OK")
</pallas_src>

<mosaic_0001>
module attributes {stable_mosaic.version = 11 : i64} {
  func.func @mlp_agent_kernel(%arg0: i32, %arg1: memref<8x16xf32, #tpu.memory_space<vmem>>, %arg2: memref<16x128xbf16, #tpu.memory_space<vmem>>, %arg3: memref<128x128xbf16, #tpu.memory_space<vmem>>, %arg4: memref<128x5xbf16, #tpu.memory_space<vmem>>, %arg5: memref<3x128xf32, #tpu.memory_space<vmem>>, %arg6: memref<8x5xf32, #tpu.memory_space<vmem>>) attributes {dimension_semantics = [#tpu.dimension_semantics<parallel>], iteration_bounds = array<i64: 1>, scalar_prefetch = 0 : i64, scratch_operands = 0 : i64, tpu.core_type = #tpu.core_type<tc>, window_params = [{transform_indices = @transform_0, window_bounds = array<i64: 8, 16>}, {pipeline_mode = #tpu.pipeline_mode<synchronous>, transform_indices = @transform_1, window_bounds = array<i64: 16, 128>}, {pipeline_mode = #tpu.pipeline_mode<synchronous>, transform_indices = @transform_2, window_bounds = array<i64: 128, 128>}, {pipeline_mode = #tpu.pipeline_mode<synchronous>, transform_indices = @transform_3, window_bounds = array<i64: 128, 5>}, {pipeline_mode = #tpu.pipeline_mode<synchronous>, transform_indices = @transform_4, window_bounds = array<i64: 3, 128>}, {transform_indices = @transform_5, window_bounds = array<i64: 8, 5>}]} {
    %c0 = arith.constant 0 : index
    %c0_0 = arith.constant 0 : index
    %0 = vector.load %arg5[%c0, %c0_0] : memref<3x128xf32, #tpu.memory_space<vmem>>, vector<3x128xf32>
    %c0_1 = arith.constant 0 : index
    %c0_2 = arith.constant 0 : index
    %1 = vector.load %arg1[%c0_1, %c0_2] : memref<8x16xf32, #tpu.memory_space<vmem>>, vector<8x16xf32>
    %2 = arith.truncf %1 : vector<8x16xf32> to vector<8x16xbf16>
    %c0_3 = arith.constant 0 : index
    %c0_4 = arith.constant 0 : index
    %3 = vector.load %arg2[%c0_3, %c0_4] : memref<16x128xbf16, #tpu.memory_space<vmem>>, vector<16x128xbf16>
    %cst = arith.constant dense<0.000000e+00> : vector<8x128xf32>
    %4 = tpu.matmul %2, %3, %cst {dimension_numbers = #tpu.dot_dimension_numbers<[1], [0], [0], [1], [0, 0, 1, 1], [], []>} : vector<8x16xbf16>, vector<16x128xbf16>, vector<8x128xf32> -> vector<8x128xf32>
    %5 = vector.extract_strided_slice %0 {offsets = [0, 0], sizes = [1, 128], strides = [1, 1]} : vector<3x128xf32> to vector<1x128xf32>
    %6 = vector.broadcast %5 : vector<1x128xf32> to vector<8x128xf32>
    %7 = arith.addf %4, %6 : vector<8x128xf32>
    %8 = math.tanh %7 : vector<8x128xf32>
    %9 = arith.truncf %8 : vector<8x128xf32> to vector<8x128xbf16>
    %c0_5 = arith.constant 0 : index
    %c0_6 = arith.constant 0 : index
    %10 = vector.load %arg3[%c0_5, %c0_6] : memref<128x128xbf16, #tpu.memory_space<vmem>>, vector<128x128xbf16>
    %cst_7 = arith.constant dense<0.000000e+00> : vector<8x128xf32>
    %11 = tpu.matmul %9, %10, %cst_7 {dimension_numbers = #tpu.dot_dimension_numbers<[1], [0], [0], [1], [0, 0, 1, 1], [], []>} : vector<8x128xbf16>, vector<128x128xbf16>, vector<8x128xf32> -> vector<8x128xf32>
    %12 = vector.extract_strided_slice %0 {offsets = [1, 0], sizes = [1, 128], strides = [1, 1]} : vector<3x128xf32> to vector<1x128xf32>
    %13 = vector.broadcast %12 : vector<1x128xf32> to vector<8x128xf32>
    %14 = arith.addf %11, %13 : vector<8x128xf32>
    %15 = math.tanh %14 : vector<8x128xf32>
    %16 = arith.truncf %15 : vector<8x128xf32> to vector<8x128xbf16>
    %c0_8 = arith.constant 0 : index
    %c0_9 = arith.constant 0 : index
    %17 = vector.load %arg4[%c0_8, %c0_9] : memref<128x5xbf16, #tpu.memory_space<vmem>>, vector<128x5xbf16>
    %cst_10 = arith.constant dense<0.000000e+00> : vector<8x5xf32>
    %18 = tpu.matmul %16, %17, %cst_10 {dimension_numbers = #tpu.dot_dimension_numbers<[1], [0], [0], [1], [0, 0, 1, 1], [], []>} : vector<8x128xbf16>, vector<128x5xbf16>, vector<8x5xf32> -> vector<8x5xf32>
    %19 = vector.extract_strided_slice %0 {offsets = [2, 0], sizes = [1, 5], strides = [1, 1]} : vector<3x128xf32> to vector<1x5xf32>
    %20 = vector.broadcast %19 : vector<1x5xf32> to vector<8x5xf32>
    %21 = arith.addf %18, %20 : vector<8x5xf32>
    %c0_11 = arith.constant 0 : index
    %c0_12 = arith.constant 0 : index
    %22 = vector.load %arg6[%c0_11, %c0_12] : memref<8x5xf32, #tpu.memory_space<vmem>>, vector<8x5xf32>
    tpu.vector_store %arg6[%c0_11, %c0_12], %21 {strides = array<i32>} : memref<8x5xf32, #tpu.memory_space<vmem>>, vector<8x5xf32>,
    return
  }
  func.func @transform_0(%arg0: i32) -> (i32, i32) {
    %c0_i32 = arith.constant 0 : i32
    %c0_i32_0 = arith.constant 0 : i32
    return %arg0, %c0_i32 : i32, i32
  }
  func.func @transform_1(%arg0: i32) -> (i32, i32) {
    %c0_i32 = arith.constant 0 : i32
    %c0_i32_0 = arith.constant 0 : i32
    %c0_i32_1 = arith.constant 0 : i32
    return %c0_i32, %c0_i32_0 : i32, i32
  }
  func.func @transform_2(%arg0: i32) -> (i32, i32) {
    %c0_i32 = arith.constant 0 : i32
    %c0_i32_0 = arith.constant 0 : i32
    %c0_i32_1 = arith.constant 0 : i32
    return %c0_i32, %c0_i32_0 : i32, i32
  }
  func.func @transform_3(%arg0: i32) -> (i32, i32) {
    %c0_i32 = arith.constant 0 : i32
    %c0_i32_0 = arith.constant 0 : i32
    %c0_i32_1 = arith.constant 0 : i32
    return %c0_i32, %c0_i32_0 : i32, i32
  }
  func.func @transform_4(%arg0: i32) -> (i32, i32) {
    %c0_i32 = arith.constant 0 : i32
    %c0_i32_0 = arith.constant 0 : i32
    %c0_i32_1 = arith.constant 0 : i32
    return %c0_i32, %c0_i32_0 : i32, i32
  }
  func.func @transform_5(%arg0: i32) -> (i32, i32) {
    %c0_i32 = arith.constant 0 : i32
    %c0_i32_0 = arith.constant 0 : i32
    return %arg0, %c0_i32 : i32, i32
  }
}

</mosaic_0001>

<llo_original>
// kernel: mlp_agent_forward.1
$region0: #{mlp_agent_forward.1}
  #allocation0 [shape = 'u32[]', space=smem, size = 0x4, offset = 0x4, fixed_abs, tag = 'smem constant byte address 0x4 - core index']
  #allocation1 [shape = 'u32[72,128]{1,0:T(1,128)}', space=vmem, size = 0x9000, scoped, tag = 'internal scratch']
  %s0 = inlined_call_operand.hbm [shape: f32[8,16], index: 0, kind: input, shape index: {}]
  %s1 = inlined_call_operand.hbm [shape: bf16[16,128], index: 1, kind: input, shape index: {}]
  %s2 = inlined_call_operand.vmem [shape: bf16[128,128], index: 2, kind: input, shape index: {}]
  %s3 = inlined_call_operand.vmem [shape: bf16[128,5], index: 3, kind: input, shape index: {}]
  %s4 = inlined_call_operand.vmem [shape: f32[3,128], index: 4, kind: input, shape index: {}]
  %s5 = inlined_call_operand.vmem [shape: f32[8,5], index: 5, kind: output, shape index: {}]
  %s6 = sld [smem:[#allocation0]]
  $region38: #{mlp_agent_forward.1} parent=0
    _
  %s8 = ssub.s32 1, %s6
  %s9 = scalar_select 0, %s8, %s6
  $region1: #{mlp_agent_forward.1} parent=0
    #allocation2 [shape = 'u8[4096]{0}', space=vmem, size = 0x1000, scoped, tag = 'input window, operand 0, single buffered']
    #allocation3 [shape = 's32[1]{0}', space=sflag, size = 0x4, scoped, tag = 'scoped memory for mlp_agent_forward.1']
    #allocation4 [shape = 'u8[4096]{0}', space=vmem, size = 0x1000, scoped, tag = 'input window, operand 1, single buffered']
    #allocation5 [shape = 's32[1]{0}', space=sflag, size = 0x4, scoped, tag = 'scoped memory for mlp_agent_forward.1']
    %10 = vsyncpa [#allocation3], 0
    %11 = vsyncpa [#allocation5], 0
    // Predicated region
    $region2: #{mlp_agent_forward.1} parent=1 // pred_check
      _
    $region3: #{mlp_agent_forward.1} parent=1 // pred_check_branch
      %13 = sbr.rel (0) target = $region5
    $region4: #{mlp_agent_forward.1} parent=1 // pred_region
      %15 = vsyncadd [#allocation3], 0
      %s17 = sshll.u32 %s0, 4
      %s18 = int_to_ptr.hbm [resolvable:$true] %s17
      %s19 = sshll.u32 [#allocation2], 4
      %s20 = int_to_ptr.vmem [resolvable:$true] %s19
      %22 = dma.hbm_to_vmem [thread:$0]  %s18, 128, %s20, [#allocation3]
    $region5: #{mlp_agent_forward.1} parent=1 // pred_fallthru
      _
    // Predicated region
    $region6: #{mlp_agent_forward.1} parent=1 // pred_check
      _
    $region7: #{mlp_agent_forward.1} parent=1 // pred_check_branch
      %24 = sbr.rel (0) target = $region9
    $region8: #{mlp_agent_forward.1} parent=1 // pred_region
      %26 = vsyncadd [#allocation5], 0
      %s27 = sshll.u32 %s1, 4
      %s28 = int_to_ptr.hbm [resolvable:$true] %s27
      %s29 = sshll.u32 [#allocation4], 4
      %s30 = int_to_ptr.vmem [resolvable:$true] %s29
      %35 = dma.hbm_to_vmem [thread:$0]  %s28, 128, %s30, [#allocation5], 64, 64, 4
    $region9: #{mlp_agent_forward.1} parent=1 // pred_fallthru
      _
    // Predicated region
    $region10: #{mlp_agent_forward.1} parent=1 // pred_check
      _
    $region11: #{mlp_agent_forward.1} parent=1 // pred_check_branch
      %37 = sbr.rel (0) target = $region13
    $region12: #{mlp_agent_forward.1} parent=1 // pred_region
      _
    $region13: #{mlp_agent_forward.1} parent=1 // pred_fallthru
      _
    // Predicated region
    $region14: #{mlp_agent_forward.1} parent=1 // pred_check
      _
    $region15: #{mlp_agent_forward.1} parent=1 // pred_check_branch
      %39 = sbr.rel (0) target = $region17
    $region16: #{mlp_agent_forward.1} parent=1 // pred_region
      _
    $region17: #{mlp_agent_forward.1} parent=1 // pred_fallthru
      _
    // Predicated region
    $region18: #{mlp_agent_forward.1} parent=1 // pred_check
      _
    $region19: #{mlp_agent_forward.1} parent=1 // pred_check_branch
      %41 = sbr.rel (0) target = $region21
    $region20: #{mlp_agent_forward.1} parent=1 // pred_region
      _
    $region21: #{mlp_agent_forward.1} parent=1 // pred_fallthru
      _
    // Predicated region
    $region22: #{mlp_agent_forward.1} parent=1 // pred_check
      _
    $region23: #{mlp_agent_forward.1} parent=1 // pred_check_branch
      %43 = sbr.rel (0) target = $region25
    $region24: #{mlp_agent_forward.1} parent=1 // pred_region
      %45 = dma.done [#allocation3], 128
    $region25: #{mlp_agent_forward.1} parent=1 // pred_fallthru
      _
    // Predicated region
    $region26: #{mlp_agent_forward.1} parent=1 // pred_check
      _
    $region27: #{mlp_agent_forward.1} parent=1 // pred_check_branch
      %47 = sbr.rel (0) target = $region29
    $region28: #{mlp_agent_forward.1} parent=1 // pred_region
      %49 = dma.done [#allocation5], 128
    $region29: #{mlp_agent_forward.1} parent=1 // pred_fallthru
      _
    %v51 = vld [vmem:[%s4] sm:$0x7]
    %v52 = vld [vmem:[#allocation2] sm:$0xff]
    %v53 = vpack.c.bf16 %v52, %v52
    %v54 = vld [vmem:[#allocation4] sm:$0xf]
    %v55 = vld [vmem:[#allocation4 + $0x4] sm:$0xf]
    %v56 = vperm.slane %v51, 0
    %v59 = vunpack.c.l.b16 %v54
    %v60 = vunpack.c.l.b16 %v55
    %v61 = vpack.c.b16 %v60, %v59
    %vm63 = vcmask 130048
    %v65 = vsel %vm63, %v53, 0
    %67 = vmatpush.bf16.msra.mxu0 0
    %68 = vmatpush.bf16.msra.mxu0 0
    %69 = vmatpush.bf16.msra.mxu0 0
    %70 = vmatpush.bf16.msra.mxu0 0
    %71 = vmatpush.bf16.msra.mxu0 0
    %72 = vmatpush.bf16.msra.mxu0 0
    %73 = vmatpush.bf16.msra.mxu0 0
    %74 = vmatpush.bf16.msra.mxu0 %v61
    %75 = vmatmul.bf16.gmra.mxu0 %v65
    %v76 = vpop.f32.mrf.mxu0
    %v77 = vadd.f32 %v56, %v76
    %v78 = vpop.f32.mrf.mxu0
    %79 = vdwg.mxu0
    %v80 = vtanh.pop %v77
    %v81 = vpack.c.bf16 %v80, %v80
    %v82 = vld [vmem:[%s2] sm:$0xf]
    %v83 = vld [vmem:[%s2 + $0x4] sm:$0xf]
    %v84 = vld [vmem:[%s2 + $0x8] sm:$0xf]
    %v85 = vld [vmem:[%s2 + $0xc] sm:$0xf]
    %v86 = vld [vmem:[%s2 + $0x10] sm:$0xf]
    %v87 = vld [vmem:[%s2 + $0x14] sm:$0xf]
    %v88 = vld [vmem:[%s2 + $0x18] sm:$0xf]
    %v89 = vld [vmem:[%s2 + $0x1c] sm:$0xf]
    %v90 = vld [vmem:[%s2 + $0x20] sm:$0xf]
    %v91 = vld [vmem:[%s2 + $0x24] sm:$0xf]
    %v92 = vld [vmem:[%s2 + $0x28] sm:$0xf]
    %v93 = vld [vmem:[%s2 + $0x2c] sm:$0xf]
    %v94 = vld [vmem:[%s2 + $0x30] sm:$0xf]
    %v95 = vld [vmem:[%s2 + $0x34] sm:$0xf]
    %v96 = vld [vmem:[%s2 + $0x38] sm:$0xf]
    %v97 = vld [vmem:[%s2 + $0x3c] sm:$0xf]
    %v98 = vperm.slane %v51, 1
    %v115 = vunpack.c.l.b16 %v82
    %v116 = vunpack.c.l.b16 %v83
    %v117 = vunpack.c.l.b16 %v84
    %v118 = vunpack.c.l.b16 %v85
    %v119 = vunpack.c.l.b16 %v86
    %v120 = vunpack.c.l.b16 %v87
    %v121 = vunpack.c.l.b16 %v88
    %v122 = vunpack.c.l.b16 %v89
    %v123 = vunpack.c.l.b16 %v90
    %v124 = vunpack.c.l.b16 %v91
    %v125 = vunpack.c.l.b16 %v92
    %v126 = vunpack.c.l.b16 %v93
    %v127 = vunpack.c.l.b16 %v94
    %v128 = vunpack.c.l.b16 %v95
    %v129 = vunpack.c.l.b16 %v96
    %v130 = vunpack.c.l.b16 %v97
    %v131 = vpack.c.b16 %v116, %v115
    %v132 = vpack.c.b16 %v118, %v117
    %v133 = vpack.c.b16 %v120, %v119
    %v134 = vpack.c.b16 %v122, %v121
    %v135 = vpack.c.b16 %v124, %v123
    %v136 = vpack.c.b16 %v126, %v125
    %v137 = vpack.c.b16 %v128, %v127
    %v138 = vpack.c.b16 %v130, %v129
    %147 = vmatpush.bf16.msra.mxu0 %v138
    %148 = vmatpush.bf16.msra.mxu0 %v137
    %149 = vmatpush.bf16.msra.mxu0 %v136
    %150 = vmatpush.bf16.msra.mxu0 %v135
    %151 = vmatpush.bf16.msra.mxu0 %v134
    %152 = vmatpush.bf16.msra.mxu0 %v133
    %153 = vmatpush.bf16.msra.mxu0 %v132
    %154 = vmatpush.bf16.msra.mxu0 %v131
    %155 = vmatmul.bf16.gmra.mxu0 %v81
    %v156 = vpop.f32.mrf.mxu0
    %v157 = vadd.f32 %v98, %v156
    %v158 = vpop.f32.mrf.mxu0
    %159 = vdwg.mxu0
    %v160 = vtanh.pop %v157
    %v161 = vpack.c.bf16 %v160, %v160
    %v162 = vld [vmem:[%s3] sm:$0xf]
    %v163 = vld [vmem:[%s3 + $0x4] sm:$0xf]
    %v164 = vld [vmem:[%s3 + $0x8] sm:$0xf]
    %v165 = vld [vmem:[%s3 + $0xc] sm:$0xf]
    %v166 = vld [vmem:[%s3 + $0x10] sm:$0xf]
    %v167 = vld [vmem:[%s3 + $0x14] sm:$0xf]
    %v168 = vld [vmem:[%s3 + $0x18] sm:$0xf]
    %v169 = vld [vmem:[%s3 + $0x1c] sm:$0xf]
    %v170 = vld [vmem:[%s3 + $0x20] sm:$0xf]
    %v171 = vld [vmem:[%s3 + $0x24] sm:$0xf]
    %v172 = vld [vmem:[%s3 + $0x28] sm:$0xf]
    %v173 = vld [vmem:[%s3 + $0x2c] sm:$0xf]
    %v174 = vld [vmem:[%s3 + $0x30] sm:$0xf]
    %v175 = vld [vmem:[%s3 + $0x34] sm:$0xf]
    %v176 = vld [vmem:[%s3 + $0x38] sm:$0xf]
    %v177 = vld [vmem:[%s3 + $0x3c] sm:$0xf]
    %v178 = vperm.slane %v51, 2
    %v195 = vunpack.c.l.b16 %v162
    %v196 = vunpack.c.l.b16 %v163
    %v197 = vunpack.c.l.b16 %v164
    %v198 = vunpack.c.l.b16 %v165
    %v199 = vunpack.c.l.b16 %v166
    %v200 = vunpack.c.l.b16 %v167
    %v201 = vunpack.c.l.b16 %v168
    %v202 = vunpack.c.l.b16 %v169
    %v203 = vunpack.c.l.b16 %v170
    %v204 = vunpack.c.l.b16 %v171
    %v205 = vunpack.c.l.b16 %v172
    %v206 = vunpack.c.l.b16 %v173
    %v207 = vunpack.c.l.b16 %v174
    %v208 = vunpack.c.l.b16 %v175
    %v209 = vunpack.c.l.b16 %v176
    %v210 = vunpack.c.l.b16 %v177
    %v211 = vpack.c.b16 %v196, %v195
    %v212 = vpack.c.b16 %v198, %v197
    %v213 = vpack.c.b16 %v200, %v199
    %v214 = vpack.c.b16 %v202, %v201
    %v215 = vpack.c.b16 %v204, %v203
    %v216 = vpack.c.b16 %v206, %v205
    %v217 = vpack.c.b16 %v208, %v207
    %v218 = vpack.c.b16 %v210, %v209
    %227 = vmatpush.bf16.msra.mxu0 %v218
    %228 = vmatpush.bf16.msra.mxu0 %v217
    %229 = vmatpush.bf16.msra.mxu0 %v216
    %230 = vmatpush.bf16.msra.mxu0 %v215
    %231 = vmatpush.bf16.msra.mxu0 %v214
    %232 = vmatpush.bf16.msra.mxu0 %v213
    %233 = vmatpush.bf16.msra.mxu0 %v212
    %234 = vmatpush.bf16.msra.mxu0 %v211
    %235 = vmatmul.bf16.gmra.mxu0 %v161
    %v236 = vpop.f32.mrf.mxu0
    %v237 = vadd.f32 %v178, %v236
    %v238 = vpop.f32.mrf.mxu0
    %239 = vdwg.mxu0
    %vm240 = vcmask 39936
    %241 = vst.msk [vmem:[%s5] sm:$0xff] %vm240, %v237
    // Predicated region
    $region30: #{mlp_agent_forward.1} parent=1 // pred_check
      _
    $region31: #{mlp_agent_forward.1} parent=1 // pred_check_branch
      %243 = sbr.rel (0) target = $region33
    $region32: #{mlp_agent_forward.1} parent=1 // pred_region
      _
    $region33: #{mlp_agent_forward.1} parent=1 // pred_fallthru
      _
    // Predicated region
    $region34: #{mlp_agent_forward.1} parent=1 // pred_check
      _
    $region35: #{mlp_agent_forward.1} parent=1 // pred_check_branch
      %245 = sbr.rel (0) target = $region37
    $region36: #{mlp_agent_forward.1} parent=1 // pred_region
      _
    $region37: #{mlp_agent_forward.1} parent=1 // pred_fallthru
      _
    %246 = vsyncpa [#allocation3], 1
    %247 = vsyncpa [#allocation5], 1

</llo_original>
